<compile_context>
chip_gen: v7x
topology: tpu7x:2x2x1
jax: 0.10.0
libtpu: 0.0.40
codegen_flags: <defaults>
</compile_context>

<pallas_src>
import numpy as np
import jax
import jax.numpy as jnp
from jax.experimental import pallas as pl
from jax.experimental.pallas import tpu as pltpu


def _round_up(x, m):
    return ((x + m - 1) // m) * m


def _pick_tile(total, candidates):
    for c in candidates:
        if total % c == 0:
            return c
    return candidates[-1]


# ---------------------------------------------------------------------------
# __init__-time math (pure numpy glue, mirrors the PyTorch constructor)
# ---------------------------------------------------------------------------
def _rodrigues_x(phi):
    # cv2.Rodrigues(phi * [1,0,0]) == rotation by phi about the x-axis.
    c, s = np.cos(phi), np.sin(phi)
    return np.array([[1.0, 0.0, 0.0],
                     [0.0,   c,  -s],
                     [0.0,   s,   c]], dtype=np.float64)


def _build_locs(out_dim, fov, radius):
    """Returns [up_loc, down_loc], each (out_dim, out_dim, 2) with (lon, lat) in [-1, 1]."""
    c_xy = (out_dim - 1) / 2.0
    wangle = (180.0 - fov) / 2.0
    w_len = 2.0 * radius * np.sin(np.radians(fov / 2.0)) / np.sin(np.radians(wangle))
    interval = w_len / (out_dim - 1)
    x_map = np.tile((np.arange(out_dim) - c_xy) * interval, [out_dim, 1])
    y_map = np.tile((np.arange(out_dim) - c_xy) * interval, [out_dim, 1]).T
    z_map = np.zeros([out_dim, out_dim], np.float64) + radius
    D = np.sqrt(x_map ** 2 + y_map ** 2 + z_map ** 2)
    xyz = np.stack([radius / D * x_map, radius / D * y_map, radius / D * z_map], axis=-1)
    reshape_xyz = xyz.reshape(out_dim * out_dim, 3).T          # (3, N)
    locs = []
    for phi in (np.pi / 2.0, -np.pi / 2.0):                    # R_lst[4:] -> up, down
        R = _rodrigues_x(phi)
        result = (R @ reshape_xyz).T                           # (N, 3)
        lon = np.arctan2(result[:, 0], result[:, 2]) / np.pi
        lat = np.arcsin(np.clip(result[:, 1] / radius, -1.0, 1.0)) / (np.pi / 2.0)
        locs.append(np.stack([lon, lat], axis=-1).reshape(out_dim, out_dim, 2))
    return locs


def _bilinear_matrix(grid_xy, H, W, align_corners=False):
    """Dense (out_pixels, H*W) matrix equal to F.grid_sample(mode='bilinear',
    padding_mode='zeros') with the given fixed grid."""
    od0, od1, _ = grid_xy.shape
    gx = grid_xy[..., 0].reshape(-1)
    gy = grid_xy[..., 1].reshape(-1)
    if align_corners:
        ix = (gx + 1.0) * 0.5 * (W - 1)
        iy = (gy + 1.0) * 0.5 * (H - 1)
    else:
        ix = ((gx + 1.0) * W - 1.0) * 0.5
        iy = ((gy + 1.0) * H - 1.0) * 0.5
    x0 = np.floor(ix); x1 = x0 + 1.0
    y0 = np.floor(iy); y1 = y0 + 1.0
    wx1 = ix - x0; wx0 = 1.0 - wx1
    wy1 = iy - y0; wy0 = 1.0 - wy1
    n_out = od0 * od1
    M = np.zeros((n_out, H * W), np.float64)
    rows = np.arange(n_out)
    for xx, yy, wx, wy in ((x0, y0, wx0, wy0), (x1, y0, wx1, wy0),
                           (x0, y1, wx0, wy1), (x1, y1, wx1, wy1)):
        valid = (xx >= 0) & (xx <= W - 1) & (yy >= 0) & (yy <= H - 1)
        idx = np.where(valid, (yy * W + xx).astype(np.int64), 0)
        np.add.at(M, (rows, idx), (wx * wy) * valid)
    return M.astype(np.float32)


# ---------------------------------------------------------------------------
# Pallas kernel: tiled (M, K) x (K, N) matmul accumulating directly into the
# f32 output block (resident in VMEM across the k axis).
# Grid = (M tiles, N tiles, max nonzero-K tiles per N tile); k is "arbitrary".
# Scalar-prefetched tables (SMEM):
#   counts[n]          -> number of nonzero K blocks for N-tile n
#   kb[n*maxc + k]     -> original K-block index (drives the x index_map)
#   wb[n*maxc + k]     -> flat tile index into compact block-major W
# Entries past counts[n] repeat the last valid index, so the DMA engine sees an
# unchanged block index (no refetch) and pl.when skips the matmul.
# ---------------------------------------------------------------------------
def _e2p_kernel(counts_ref, kb_ref, wb_ref, x_ref, w_ref, o_ref):
    n = pl.program_id(1)
    k = pl.program_id(2)

    @pl.when(k == 0)
    def _():
        o_ref[...] = jnp.zeros_like(o_ref)

    @pl.when(k < counts_ref[n])
    def _():
        o_ref[...] += jnp.dot(x_ref[...], w_ref[...],
                              preferred_element_type=jnp.float32)


class E2P:
    def __init__(self, equ_size, out_dim, fov, radius=128, up_flip=True,
                 align_corners=False):
        self.equ_h, self.equ_w = equ_size
        self.out_dim = out_dim
        up_loc, down_loc = _build_locs(out_dim, fov, radius)
        self._locs = (up_loc, down_loc)
        self._up_flip = up_flip

        HW = self.equ_h * self.equ_w
        OD2 = out_dim * out_dim
        self.hw = HW
        self.n_out = 2 * OD2                     # up cols then down cols (lane-dense)

        Mu = _bilinear_matrix(up_loc, self.equ_h, self.equ_w, align_corners)
        Md = _bilinear_matrix(down_loc, self.equ_h, self.equ_w, align_corners)
        if up_flip:
            # torch.flip(up_views, dims=[2]) == flip output rows; bake into the matrix
            Mu = Mu.reshape(out_dim, out_dim, -1)[::-1].reshape(OD2, -1)
        # Fused weight: out[:, :OD2] = x @ Mu.T ; out[:, OD2:] = x @ Md.T
        W = np.concatenate([Mu, Md], axis=0).T.astype(np.float32)   # (HW, 2*OD2)

        # --- tile sizes: (8,128)-aligned, chosen to divide padded extents so the
        # wrapper never has to jnp.pad x in the common case ---
        self.kp = _round_up(HW, 128)
        self.np_ = _round_up(self.n_out, 128)
        self.tk = _pick_tile(self.kp, (1024, 512, 256, 128))
        self.tn = _pick_tile(self.np_, (512, 256, 128))

        Wp = np.zeros((self.kp, self.np_), np.float32)
        Wp[:HW, :self.n_out] = W

        nkb = self.kp // self.tk
        nnb = self.np_ // self.tn
        self.nnb = nnb

        # 2D zero-tile skip: per N tile, the K blocks with any nonzero weight.
        # (Each output pixel has 4 taps; up/down column bands touch disjoint
        # equirect rows, so most (K-block, N-tile) tiles are identically zero.)
        kb_lists = []
        for j in range(nnb):
            col = Wp[:, j * self.tn:(j + 1) * self.tn]
            nz = [k for k in range(nkb)
                  if np.any(col[k * self.tk:(k + 1) * self.tk])]
            kb_lists.append(nz)
        counts = np.array([len(v) for v in kb_lists], np.int32)
        maxc = max(1, int(counts.max()))
        self.maxc = maxc

        # Compact, block-major W: only the nonzero (tk, tn) tiles, contiguous.
        tiles = []
        kb_tab = np.zeros((nnb, maxc), np.int32)
        wb_tab = np.zeros((nnb, maxc), np.int32)
        for j, nz in enumerate(kb_lists):
            for i, k in enumerate(nz):
                kb_tab[j, i] = k
                wb_tab[j, i] = len(tiles)
                tiles.append(Wp[k * self.tk:(k + 1) * self.tk,
                                j * self.tn:(j + 1) * self.tn])
            # pad with repeats of the last valid entry -> same block index, no DMA
            last_k = nz[-1] if nz else 0
            last_w = wb_tab[j, len(nz) - 1] if nz else 0
            for i in range(len(nz), maxc):
                kb_tab[j, i] = last_k
                wb_tab[j, i] = last_w
        if not tiles:
            tiles.append(np.zeros((self.tk, self.tn), np.float32))
        w_blocks = np.stack(tiles, axis=0)            # (T, tk, tn) contiguous tiles

        # bf16 weights: half the HBM/VMEM traffic, native MXU path; f32 accumulate.
        self.w = jnp.asarray(w_blocks).astype(jnp.bfloat16)
        self.counts = jnp.asarray(counts)
        self.kb = jnp.asarray(kb_tab.reshape(-1))     # flat -> compact SMEM padding
        self.wb = jnp.asarray(wb_tab.reshape(-1))
        self.total_tiles = int(counts.sum())

    def __call__(self, batch):
        N, C, H, Wd = batch.shape
        assert (H, Wd) == (self.equ_h, self.equ_w)
        HW = self.hw
        OD2 = self.out_dim * self.out_dim
        M = N * C

        # One M tile when M is small; otherwise 256-row tiles (feeds the v6e/v7x
        # 256-wide MXU; fine on v5e's 4x128 MXU too).
        tm = _round_up(M, 8) if M <= 512 else 256
        mp = _round_up(M, tm)

        # Fold batch*channel into the matmul M dimension; cast to bf16 ONCE in
        # the wrapper (fused with the reshape). Pad only if extents misalign.
        x = batch.reshape(M, HW).astype(jnp.bfloat16)
        if mp != M or self.kp != HW:
            x = jnp.pad(x, ((0, mp - M), (0, self.kp - HW)))

        maxc = self.maxc
        grid = (mp // tm, self.np_ // self.tn, maxc)

        flops = 2 * mp * self.tk * self.tn * self.total_tiles
        bytes_accessed = (mp * self.tk * 2 * self.total_tiles                      # x tiles (re-read per nonzero (n,k))
                          + (mp // tm) * self.total_tiles * self.tk * self.tn * 2  # W tiles (re-read per M tile)
                          + mp * self.np_ * 4)                                     # output

        out = pl.pallas_call(
            _e2p_kernel,
            out_shape=jax.ShapeDtypeStruct((mp, self.np_), jnp.float32),
            grid_spec=pltpu.PrefetchScalarGridSpec(
                num_scalar_prefetch=3,
                grid=grid,
                in_specs=[
                    # image rows: (tm, tk); K block chosen by the per-N-tile table
                    pl.BlockSpec((tm, self.tk),
                                 lambda m, n, k, cnt, kb, wb: (m, kb[n * maxc + k])),
                    # compact block-major bilinear weight: one contiguous (tk, tn) tile
                    pl.BlockSpec((None, self.tk, self.tn),
                                 lambda m, n, k, cnt, kb, wb: (wb[n * maxc + k], 0, 0)),
                ],
                out_specs=pl.BlockSpec((tm, self.tn),
                                       lambda m, n, k, cnt, kb, wb: (m, n)),
            ),
            compiler_params=pltpu.CompilerParams(
                dimension_semantics=("parallel", "parallel", "arbitrary")),
            cost_estimate=pl.CostEstimate(
                flops=int(flops), transcendentals=0,
                bytes_accessed=int(bytes_accessed)),
        )(self.counts, self.kb, self.wb, x, self.w)

        out = out[:M, :self.n_out]
        up = out[:, :OD2].reshape(N, C, self.out_dim, self.out_dim)
        down = out[:, OD2:].reshape(N, C, self.out_dim, self.out_dim)
        return up, down


# ---------------------------------------------------------------------------
# Pure-numpy reference of F.grid_sample for correctness checking
# ---------------------------------------------------------------------------
def _grid_sample_ref(img, grid_xy, align_corners=False):
    C, H, W = img.shape
    gx = grid_xy[..., 0]; gy = grid_xy[..., 1]
    if align_corners:
        ix = (gx + 1.0) * 0.5 * (W - 1); iy = (gy + 1.0) * 0.5 * (H - 1)
    else:
        ix = ((gx + 1.0) * W - 1.0) * 0.5; iy = ((gy + 1.0) * H - 1.0) * 0.5
    x0 = np.floor(ix).astype(int); x1 = x0 + 1
    y0 = np.floor(iy).astype(int); y1 = y0 + 1

    def pick(yy, xx):
        valid = (xx >= 0) & (xx <= W - 1) & (yy >= 0) & (yy <= H - 1)
        return img[:, np.clip(yy, 0, H - 1), np.clip(xx, 0, W - 1)] * valid

    wx1 = ix - x0; wx0 = 1.0 - wx1
    wy1 = iy - y0; wy0 = 1.0 - wy1
    return (pick(y0, x0) * (wx0 * wy0) + pick(y0, x1) * (wx1 * wy0)
            + pick(y1, x0) * (wx0 * wy1) + pick(y1, x1) * (wx1 * wy1))


if __name__ == "__main__":
    # Small shapes: equirect image 16x32 (H x W), 4 channels, batch 2, 8x8 views.
    equ_size = (16, 32)
    out_dim = 8
    fov = 90
    batch_shape = (2, 4, equ_size[0], equ_size[1])

    key = jax.random.PRNGKey(0)
    batch = jax.random.normal(key, batch_shape, dtype=jnp.float32)

    model = E2P(equ_size, out_dim, fov, radius=128, up_flip=True)
    up_views, down_views = model(batch)
    up_views, down_views = jax.block_until_ready((up_views, down_views))

    # Correctness check against a float64 numpy bilinear grid_sample reference.
    # Tolerances loosened for the bf16 weight/activation MXU path.
    np_batch = np.asarray(batch, dtype=np.float64)
    up_loc, down_loc = model._locs
    ref_up, ref_down = [], []
    for i in range(batch_shape[0]):
        u = _grid_sample_ref(np_batch[i], up_loc)
        d = _grid_sample_ref(np_batch[i], down_loc)
        ref_up.append(u[:, ::-1, :])                 # torch.flip(..., dims=[2])
        ref_down.append(d)
    ref_up = np.stack(ref_up, 0)
    ref_down = np.stack(ref_down, 0)
    np.testing.assert_allclose(np.asarray(up_views), ref_up, rtol=2e-2, atol=3e-2)
    np.testing.assert_allclose(np.asarray(down_views), ref_down, rtol=2e-2, atol=3e-2)

    print("KERNEL_OK")
</pallas_src>

<mosaic_0001>
module attributes {stable_mosaic.version = 11 : i64} {
  func.func @_e2p_kernel(%arg0: i32, %arg1: i32, %arg2: i32, %arg3: memref<1xi32, #tpu.memory_space<smem>>, %arg4: memref<1xi32, #tpu.memory_space<smem>>, %arg5: memref<1xi32, #tpu.memory_space<smem>>, %arg6: memref<8x512xbf16, #tpu.memory_space<vmem>>, %arg7: memref<1x512x128xbf16, #tpu.memory_space<vmem>>, %arg8: memref<8x128xf32, #tpu.memory_space<vmem>>) attributes {dimension_semantics = [#tpu.dimension_semantics<parallel>, #tpu.dimension_semantics<parallel>, #tpu.dimension_semantics<arbitrary>], iteration_bounds = array<i64: 1, 1, 1>, scalar_prefetch = 3 : i64, scratch_operands = 0 : i64, tpu.core_type = #tpu.core_type<tc>, window_params = [{transform_indices = @transform_0, window_bounds = array<i64: 8, 512>}, {transform_indices = @transform_1, window_bounds = array<i64: 1, 512, 128>}, {transform_indices = @transform_2, window_bounds = array<i64: 8, 128>}]} {
    %c0_i32 = arith.constant 0 : i32
    %0 = arith.cmpi eq, %arg2, %c0_i32 : i32
    %1 = arith.extui %0 : i1 to i32
    %c0_i32_0 = arith.constant 0 : i32
    %2 = arith.cmpi ne, %1, %c0_i32_0 : i32
    scf.if %2 {
      %cst = arith.constant 0.000000e+00 : f32
      %8 = vector.broadcast %cst : f32 to vector<8x128xf32>
      %c0 = arith.constant 0 : index
      %c0_2 = arith.constant 0 : index
      %9 = vector.load %arg8[%c0, %c0_2] : memref<8x128xf32, #tpu.memory_space<vmem>>, vector<8x128xf32>
      tpu.vector_store %arg8[%c0, %c0_2], %8 {strides = array<i32>} : memref<8x128xf32, #tpu.memory_space<vmem>>, vector<8x128xf32>,
    } else {
    }
    %3 = arith.index_cast %arg1 : i32 to index
    %4 = memref.load %arg3[%3] : memref<1xi32, #tpu.memory_space<smem>>
    %5 = arith.cmpi slt, %arg2, %4 : i32
    %6 = arith.extui %5 : i1 to i32
    %c0_i32_1 = arith.constant 0 : i32
    %7 = arith.cmpi ne, %6, %c0_i32_1 : i32
    scf.if %7 {
      %c0 = arith.constant 0 : index
      %c0_2 = arith.constant 0 : index
      %8 = vector.load %arg8[%c0, %c0_2] : memref<8x128xf32, #tpu.memory_space<vmem>>, vector<8x128xf32>
      %c0_3 = arith.constant 0 : index
      %c0_4 = arith.constant 0 : index
      %9 = vector.load %arg6[%c0_3, %c0_4] : memref<8x512xbf16, #tpu.memory_space<vmem>>, vector<8x512xbf16>
      %c0_5 = arith.constant 0 : index
      %c0_6 = arith.constant 0 : index
      %c0_7 = arith.constant 0 : index
      %10 = vector.load %arg7[%c0_5, %c0_6, %c0_7] : memref<1x512x128xbf16, #tpu.memory_space<vmem>>, vector<1x512x128xbf16>
      %11 = vector.shape_cast %10 : vector<1x512x128xbf16> to vector<512x128xbf16>
      %cst = arith.constant dense<0.000000e+00> : vector<8x128xf32>
      %12 = tpu.matmul %9, %11, %cst {dimension_numbers = #tpu.dot_dimension_numbers<[1], [0], [0], [1], [0, 0, 1, 1], [], []>} : vector<8x512xbf16>, vector<512x128xbf16>, vector<8x128xf32> -> vector<8x128xf32>
      %13 = arith.addf %8, %12 : vector<8x128xf32>
      %c0_8 = arith.constant 0 : index
      %c0_9 = arith.constant 0 : index
      %14 = vector.load %arg8[%c0_8, %c0_9] : memref<8x128xf32, #tpu.memory_space<vmem>>, vector<8x128xf32>
      tpu.vector_store %arg8[%c0_8, %c0_9], %13 {strides = array<i32>} : memref<8x128xf32, #tpu.memory_space<vmem>>, vector<8x128xf32>,
    } else {
    }
    return
  }
  func.func @transform_0(%arg0: i32, %arg1: i32, %arg2: i32, %arg3: memref<1xi32, #tpu.memory_space<smem>>, %arg4: memref<1xi32, #tpu.memory_space<smem>>, %arg5: memref<1xi32, #tpu.memory_space<smem>>) -> (i32, i32) {
    %c1_i32 = arith.constant 1 : i32
    %0 = arith.muli %arg1, %c1_i32 : i32
    %1 = arith.addi %0, %arg2 : i32
    %2 = arith.index_cast %1 : i32 to index
    %3 = memref.load %arg4[%2] : memref<1xi32, #tpu.memory_space<smem>>
    %c0_i32 = arith.constant 0 : i32
    return %arg0, %3 : i32, i32
  }
  func.func @transform_1(%arg0: i32, %arg1: i32, %arg2: i32, %arg3: memref<1xi32, #tpu.memory_space<smem>>, %arg4: memref<1xi32, #tpu.memory_space<smem>>, %arg5: memref<1xi32, #tpu.memory_space<smem>>) -> (i32, i32, i32) {
    %c1_i32 = arith.constant 1 : i32
    %0 = arith.muli %arg1, %c1_i32 : i32
    %1 = arith.addi %0, %arg2 : i32
    %2 = arith.index_cast %1 : i32 to index
    %3 = memref.load %arg5[%2] : memref<1xi32, #tpu.memory_space<smem>>
    %c0_i32 = arith.constant 0 : i32
    %c0_i32_0 = arith.constant 0 : i32
    %c0_i32_1 = arith.constant 0 : i32
    return %3, %c0_i32, %c0_i32_0 : i32, i32, i32
  }
  func.func @transform_2(%arg0: i32, %arg1: i32, %arg2: i32, %arg3: memref<1xi32, #tpu.memory_space<smem>>, %arg4: memref<1xi32, #tpu.memory_space<smem>>, %arg5: memref<1xi32, #tpu.memory_space<smem>>) -> (i32, i32) {
    %c0_i32 = arith.constant 0 : i32
    return %arg0, %arg1 : i32, i32
  }
}

</mosaic_0001>

<llo_original>
// kernel: tpu_custom_call.1
$region0: #{tpu_custom_call.1}
  #allocation0 [shape = 'u32[]', space=smem, size = 0x4, offset = 0x4, fixed_abs, tag = 'smem constant byte address 0x4 - core index']
  #allocation1 [shape = 'u32[144,128]{1,0:T(1,128)}', space=vmem, size = 0x12000, scoped, tag = 'internal scratch']
  #allocation2 [shape = 's32[1]{0}', space=sflag, size = 0x4, scoped, tag = 'scoped memory for tpu_custom_call.1']
  #allocation3 [shape = 's32[1]{0:T(128)S(6)}', space=smem, size = 0x200, scoped, tag = 'prefetched SMEM operand 0']
  #allocation4 [shape = 's32[1]{0:T(128)S(6)}', space=smem, size = 0x200, scoped, tag = 'prefetched SMEM operand 1']
  #allocation5 [shape = 's32[1]{0:T(128)S(6)}', space=smem, size = 0x200, scoped, tag = 'prefetched SMEM operand 2']
  %s0 = inlined_call_operand.<no memory space> [shape: s32[1], index: 0, kind: input, shape index: {}]
  %s1 = inlined_call_operand.<no memory space> [shape: s32[1], index: 1, kind: input, shape index: {}]
  %s2 = inlined_call_operand.<no memory space> [shape: s32[1], index: 2, kind: input, shape index: {}]
  %s3 = inlined_call_operand.hbm [shape: bf16[8,512], index: 3, kind: input, shape index: {}]
  %s4 = inlined_call_operand.hbm [shape: bf16[1,512,128], index: 4, kind: input, shape index: {}]
  %s5 = inlined_call_operand.hbm [shape: f32[8,128], index: 5, kind: output, shape index: {}]
  %s6 = sld [smem:[#allocation0]]
  $region34: #{tpu_custom_call.1} parent=0
    _
  %s8 = ssub.s32 1, %s6
  %s9 = scalar_select 0, %s8, %s6
  %10 = sst [smem:[#allocation3]] %s0
  %11 = sst [smem:[#allocation4]] %s1
  %12 = sst [smem:[#allocation5]] %s2
  $region1: #{tpu_custom_call.1} parent=0
    #allocation6 [shape = 'u8[8192]{0}', space=vmem, size = 0x2000, scoped, tag = 'input window, operand 3, single buffered']
    #allocation7 [shape = 's32[1]{0}', space=sflag, size = 0x4, scoped, tag = 'scoped memory for tpu_custom_call.1']
    #allocation8 [shape = 's32[1]{0}', space=sflag, size = 0x4, scoped, tag = 'scoped memory for tpu_custom_call.1']
    #allocation9 [shape = 'u8[131072]{0}', space=vmem, size = 0x20000, scoped, tag = 'input window, operand 4, single buffered']
    #allocation10 [shape = 's32[1]{0}', space=sflag, size = 0x4, scoped, tag = 'scoped memory for tpu_custom_call.1']
    #allocation11 [shape = 'u8[4096]{0}', space=vmem, size = 0x1000, scoped, tag = 'output window, operand 0, single buffered']
    %13 = vsyncpa [#allocation7], 0
    %14 = vsyncpa [#allocation10], 0
    %15 = vsyncpa [#allocation8], 0
    // Predicated region
    $region2: #{tpu_custom_call.1} parent=1 // pred_check
      _
    $region3: #{tpu_custom_call.1} parent=1 // pred_check_branch
      %17 = sbr.rel (0) target = $region5
    $region4: #{tpu_custom_call.1} parent=1 // pred_region
      %s18 = sadd.s32 0, 0
      %s19 = sld [smem:[#allocation4 + %s18]]
      %s20 = smul.u32 4, %s19
      %s22 = ssub.s32 256, 256
      %23 = vsyncadd [#allocation7], %s22
      %s24 = smul.addr %s20, 64
      %s25 = scalar_lea.hbm %s3, %s24
      %s27 = sshll.u32 [#allocation6], 4
      %s28 = int_to_ptr.vmem [resolvable:$true] %s27
      %30 = dma.hbm_to_vmem [thread:$0]  %s25, 256, %s28, [#allocation7]
    $region5: #{tpu_custom_call.1} parent=1 // pred_fallthru
      _
    // Predicated region
    $region6: #{tpu_custom_call.1} parent=1 // pred_check
      _
    $region7: #{tpu_custom_call.1} parent=1 // pred_check_branch
      %32 = sbr.rel (0) target = $region9
    $region8: #{tpu_custom_call.1} parent=1 // pred_region
      %s33 = sadd.s32 0, 0
      %s34 = sld [smem:[#allocation5 + %s33]]
      %s36 = ssub.s32 4096, 4096
      %37 = vsyncadd [#allocation10], %s36
      %s38 = smul.addr %s34, 64
      %s39 = smul.addr %s38, 64
      %s40 = scalar_lea.hbm %s4, %s39
      %s41 = sshll.u32 [#allocation9], 4
      %s42 = int_to_ptr.vmem [resolvable:$true] %s41
      %47 = dma.hbm_to_vmem [thread:$0]  %s40, 4096, %s42, [#allocation10], 64, 64, 4
    $region9: #{tpu_custom_call.1} parent=1 // pred_fallthru
      _
    // Predicated region
    $region10: #{tpu_custom_call.1} parent=1 // pred_check
      _
    $region11: #{tpu_custom_call.1} parent=1 // pred_check_branch
      %49 = sbr.rel (0) target = $region13
    $region12: #{tpu_custom_call.1} parent=1 // pred_region
      %50 = dma.done [#allocation7], 256
    $region13: #{tpu_custom_call.1} parent=1 // pred_fallthru
      _
    // Predicated region
    $region14: #{tpu_custom_call.1} parent=1 // pred_check
      _
    $region15: #{tpu_custom_call.1} parent=1 // pred_check_branch
      %52 = sbr.rel (0) target = $region17
    $region16: #{tpu_custom_call.1} parent=1 // pred_region
      %53 = dma.done [#allocation10], 4096
    $region17: #{tpu_custom_call.1} parent=1 // pred_fallthru
      _
    %s54 = sadd.s32 0, 0
    %s55 = sld [smem:[#allocation4 + %s54]]
    %s56 = smul.u32 4, %s55
    %s57 = sadd.s32 0, 0
    %s58 = sld [smem:[#allocation5 + %s57]]
    %p60 = scmp.eq.s32.totalorder 0, 0
    // Predicated region
    $region18: #{tpu_custom_call.1} parent=1 // pred_check
      %p61 = pneg %p60
    $region19: #{tpu_custom_call.1} parent=1 // pred_check_branch
      %63 = sbr.rel (%p61) target = $region21
    $region20: #{tpu_custom_call.1} parent=1 // pred_region
      %64 = vst [vmem:[#allocation11] sm:$0xff] 0.0
    $region21: #{tpu_custom_call.1} parent=1 // pred_fallthru
      _
    %s65 = sld [smem:[#allocation3]]
    %p66 = scmp.lt.s32.totalorder 0, %s65
    // Predicated region
    $region22: #{tpu_custom_call.1} parent=1 // pred_check
      %p67 = pneg %p66
    $region23: #{tpu_custom_call.1} parent=1 // pred_check_branch
      %69 = sbr.rel (%p67) target = $region25
    $region24: #{tpu_custom_call.1} parent=1 // pred_region
      %v70 = vld [vmem:[#allocation11] sm:$0xff]
      %v71 = vld [vmem:[#allocation6] sm:$0xff]
      %v72 = vld [vmem:[#allocation6 + $0x8] sm:$0xff]
      %v73 = vld [vmem:[#allocation9] sm:$0xf]
      %v74 = vld [vmem:[#allocation9 + $0x4] sm:$0xf]
      %v75 = vld [vmem:[#allocation9 + $0x8] sm:$0xf]
      %v76 = vld [vmem:[#allocation9 + $0xc] sm:$0xf]
      %v77 = vld [vmem:[#allocation9 + $0x10] sm:$0xf]
      %v78 = vld [vmem:[#allocation9 + $0x14] sm:$0xf]
      %v79 = vld [vmem:[#allocation9 + $0x18] sm:$0xf]
      %v80 = vld [vmem:[#allocation9 + $0x1c] sm:$0xf]
      %v81 = vld [vmem:[#allocation9 + $0x20] sm:$0xf]
      %v82 = vld [vmem:[#allocation9 + $0x24] sm:$0xf]
      %v83 = vld [vmem:[#allocation9 + $0x28] sm:$0xf]
      %v84 = vld [vmem:[#allocation9 + $0x2c] sm:$0xf]
      %v85 = vld [vmem:[#allocation9 + $0x30] sm:$0xf]
      %v86 = vld [vmem:[#allocation9 + $0x34] sm:$0xf]
      %v87 = vld [vmem:[#allocation9 + $0x38] sm:$0xf]
      %v88 = vld [vmem:[#allocation9 + $0x3c] sm:$0xf]
      %v89 = vld [vmem:[#allocation9 + $0x40] sm:$0xf]
      %v90 = vld [vmem:[#allocation9 + $0x44] sm:$0xf]
      %v91 = vld [vmem:[#allocation9 + $0x48] sm:$0xf]
      %v92 = vld [vmem:[#allocation9 + $0x4c] sm:$0xf]
      %v93 = vld [vmem:[#allocation9 + $0x50] sm:$0xf]
      %v94 = vld [vmem:[#allocation9 + $0x54] sm:$0xf]
      %v95 = vld [vmem:[#allocation9 + $0x58] sm:$0xf]
      %v96 = vld [vmem:[#allocation9 + $0x5c] sm:$0xf]
      %v97 = vld [vmem:[#allocation9 + $0x60] sm:$0xf]
      %v98 = vld [vmem:[#allocation9 + $0x64] sm:$0xf]
      %v99 = vld [vmem:[#allocation9 + $0x68] sm:$0xf]
      %v100 = vld [vmem:[#allocation9 + $0x6c] sm:$0xf]
      %v101 = vld [vmem:[#allocation9 + $0x70] sm:$0xf]
      %v102 = vld [vmem:[#allocation9 + $0x74] sm:$0xf]
      %v103 = vld [vmem:[#allocation9 + $0x78] sm:$0xf]
      %v104 = vld [vmem:[#allocation9 + $0x7c] sm:$0xf]
      %v105 = vld [vmem:[#allocation9 + $0x80] sm:$0xf]
      %v106 = vld [vmem:[#allocation9 + $0x84] sm:$0xf]
      %v107 = vld [vmem:[#allocation9 + $0x88] sm:$0xf]
      %v108 = vld [vmem:[#allocation9 + $0x8c] sm:$0xf]
      %v109 = vld [vmem:[#allocation9 + $0x90] sm:$0xf]
      %v110 = vld [vmem:[#allocation9 + $0x94] sm:$0xf]
      %v111 = vld [vmem:[#allocation9 + $0x98] sm:$0xf]
      %v112 = vld [vmem:[#allocation9 + $0x9c] sm:$0xf]
      %v113 = vld [vmem:[#allocation9 + $0xa0] sm:$0xf]
      %v114 = vld [vmem:[#allocation9 + $0xa4] sm:$0xf]
      %v115 = vld [vmem:[#allocation9 + $0xa8] sm:$0xf]
      %v116 = vld [vmem:[#allocation9 + $0xac] sm:$0xf]
      %v117 = vld [vmem:[#allocation9 + $0xb0] sm:$0xf]
      %v118 = vld [vmem:[#allocation9 + $0xb4] sm:$0xf]
      %v119 = vld [vmem:[#allocation9 + $0xb8] sm:$0xf]
      %v120 = vld [vmem:[#allocation9 + $0xbc] sm:$0xf]
      %v121 = vld [vmem:[#allocation9 + $0xc0] sm:$0xf]
      %v122 = vld [vmem:[#allocation9 + $0xc4] sm:$0xf]
      %v123 = vld [vmem:[#allocation9 + $0xc8] sm:$0xf]
      %v124 = vld [vmem:[#allocation9 + $0xcc] sm:$0xf]
      %v125 = vld [vmem:[#allocation9 + $0xd0] sm:$0xf]
      %v126 = vld [vmem:[#allocation9 + $0xd4] sm:$0xf]
      %v127 = vld [vmem:[#allocation9 + $0xd8] sm:$0xf]
      %v128 = vld [vmem:[#allocation9 + $0xdc] sm:$0xf]
      %v129 = vld [vmem:[#allocation9 + $0xe0] sm:$0xf]
      %v130 = vld [vmem:[#allocation9 + $0xe4] sm:$0xf]
      %v131 = vld [vmem:[#allocation9 + $0xe8] sm:$0xf]
      %v132 = vld [vmem:[#allocation9 + $0xec] sm:$0xf]
      %v133 = vld [vmem:[#allocation9 + $0xf0] sm:$0xf]
      %v134 = vld [vmem:[#allocation9 + $0xf4] sm:$0xf]
      %v135 = vld [vmem:[#allocation9 + $0xf8] sm:$0xf]
      %v136 = vld [vmem:[#allocation9 + $0xfc] sm:$0xf]
      %v139 = vunpack.c.l.b16 %v71
      %v140 = vunpack.c.h.b16 %v71
      %v141 = vunpack.c.l.b16 %v72
      %v142 = vunpack.c.h.b16 %v72
      %v143 = vpack.c.b16 %v139, %v139
      %v144 = vpack.c.b16 %v140, %v140
      %v145 = vpack.c.b16 %v141, %v141
      %v146 = vpack.c.b16 %v142, %v142
      %v215 = vunpack.c.l.b16 %v73
      %v216 = vunpack.c.l.b16 %v74
      %v217 = vunpack.c.l.b16 %v75
      %v218 = vunpack.c.l.b16 %v76
      %v219 = vunpack.c.l.b16 %v77
      %v220 = vunpack.c.l.b16 %v78
      %v221 = vunpack.c.l.b16 %v79
      %v222 = vunpack.c.l.b16 %v80
      %v223 = vunpack.c.l.b16 %v81
      %v224 = vunpack.c.l.b16 %v82
      %v225 = vunpack.c.l.b16 %v83
      %v226 = vunpack.c.l.b16 %v84
      %v227 = vunpack.c.l.b16 %v85
      %v228 = vunpack.c.l.b16 %v86
      %v229 = vunpack.c.l.b16 %v87
      %v230 = vunpack.c.l.b16 %v88
      %v231 = vunpack.c.l.b16 %v89
      %v232 = vunpack.c.l.b16 %v90
      %v233 = vunpack.c.l.b16 %v91
      %v234 = vunpack.c.l.b16 %v92
      %v235 = vunpack.c.l.b16 %v93
      %v236 = vunpack.c.l.b16 %v94
      %v237 = vunpack.c.l.b16 %v95
      %v238 = vunpack.c.l.b16 %v96
      %v239 = vunpack.c.l.b16 %v97
      %v240 = vunpack.c.l.b16 %v98
      %v241 = vunpack.c.l.b16 %v99
      %v242 = vunpack.c.l.b16 %v100
      %v243 = vunpack.c.l.b16 %v101
      %v244 = vunpack.c.l.b16 %v102
      %v245 = vunpack.c.l.b16 %v103
      %v246 = vunpack.c.l.b16 %v104
      %v247 = vunpack.c.l.b16 %v105
      %v248 = vunpack.c.l.b16 %v106
      %v249 = vunpack.c.l.b16 %v107
      %v250 = vunpack.c.l.b16 %v108
      %v251 = vunpack.c.l.b16 %v109
      %v252 = vunpack.c.l.b16 %v110
      %v253 = vunpack.c.l.b16 %v111
      %v254 = vunpack.c.l.b16 %v112
      %v255 = vunpack.c.l.b16 %v113
      %v256 = vunpack.c.l.b16 %v114
      %v257 = vunpack.c.l.b16 %v115
      %v258 = vunpack.c.l.b16 %v116
      %v259 = vunpack.c.l.b16 %v117
      %v260 = vunpack.c.l.b16 %v118
      %v261 = vunpack.c.l.b16 %v119
      %v262 = vunpack.c.l.b16 %v120
      %v263 = vunpack.c.l.b16 %v121
      %v264 = vunpack.c.l.b16 %v122
      %v265 = vunpack.c.l.b16 %v123
      %v266 = vunpack.c.l.b16 %v124
      %v267 = vunpack.c.l.b16 %v125
      %v268 = vunpack.c.l.b16 %v126
      %v269 = vunpack.c.l.b16 %v127
      %v270 = vunpack.c.l.b16 %v128
      %v271 = vunpack.c.l.b16 %v129
      %v272 = vunpack.c.l.b16 %v130
      %v273 = vunpack.c.l.b16 %v131
      %v274 = vunpack.c.l.b16 %v132
      %v275 = vunpack.c.l.b16 %v133
      %v276 = vunpack.c.l.b16 %v134
      %v277 = vunpack.c.l.b16 %v135
      %v278 = vunpack.c.l.b16 %v136
      %v279 = vpack.c.b16 %v216, %v215
      %v280 = vpack.c.b16 %v218, %v217
      %v281 = vpack.c.b16 %v220, %v219
      %v282 = vpack.c.b16 %v222, %v221
      %v283 = vpack.c.b16 %v224, %v223
      %v284 = vpack.c.b16 %v226, %v225
      %v285 = vpack.c.b16 %v228, %v227
      %v286 = vpack.c.b16 %v230, %v229
      %v287 = vpack.c.b16 %v232, %v231
      %v288 = vpack.c.b16 %v234, %v233
      %v289 = vpack.c.b16 %v236, %v235
      %v290 = vpack.c.b16 %v238, %v237
      %v291 = vpack.c.b16 %v240, %v239
      %v292 = vpack.c.b16 %v242, %v241
      %v293 = vpack.c.b16 %v244, %v243
      %v294 = vpack.c.b16 %v246, %v245
      %v295 = vpack.c.b16 %v248, %v247
      %v296 = vpack.c.b16 %v250, %v249
      %v297 = vpack.c.b16 %v252, %v251
      %v298 = vpack.c.b16 %v254, %v253
      %v299 = vpack.c.b16 %v256, %v255
      %v300 = vpack.c.b16 %v258, %v257
      %v301 = vpack.c.b16 %v260, %v259
      %v302 = vpack.c.b16 %v262, %v261
      %v303 = vpack.c.b16 %v264, %v263
      %v304 = vpack.c.b16 %v266, %v265
      %v305 = vpack.c.b16 %v268, %v267
      %v306 = vpack.c.b16 %v270, %v269
      %v307 = vpack.c.b16 %v272, %v271
      %v308 = vpack.c.b16 %v274, %v273
      %v309 = vpack.c.b16 %v276, %v275
      %v310 = vpack.c.b16 %v278, %v277
      %343 = vmatprep.subr.bf16.mxu0 0
      %344 = vmatpush1.bf16.msra.mxu0 %v279
      %345 = vmatprep.subr.bf16.mxu0 0
      %346 = vmatpush1.bf16.msra.mxu0 %v280
      %347 = vmatprep.subr.bf16.mxu0 0
      %348 = vmatpush1.bf16.msra.mxu0 %v281
      %349 = vmatprep.subr.bf16.mxu0 0
      %350 = vmatpush1.bf16.msra.mxu0 %v282
      %351 = vmatprep.subr.bf16.mxu0 0
      %352 = vmatpush1.bf16.msra.mxu0 %v283
      %353 = vmatprep.subr.bf16.mxu0 0
      %354 = vmatpush1.bf16.msra.mxu0 %v284
      %355 = vmatprep.subr.bf16.mxu0 0
      %356 = vmatpush1.bf16.msra.mxu0 %v285
      %357 = vmatprep.subr.bf16.mxu0 0
      %358 = vmatpush1.bf16.msra.mxu0 %v286
      %359 = vmatprep.subr.bf16.mxu0 0
      %360 = vmatpush1.bf16.msra.mxu0 %v287
      %361 = vmatprep.subr.bf16.mxu0 0
      %362 = vmatpush1.bf16.msra.mxu0 %v288
      %363 = vmatprep.subr.bf16.mxu0 0
      %364 = vmatpush1.bf16.msra.mxu0 %v289
      %365 = vmatprep.subr.bf16.mxu0 0
      %366 = vmatpush1.bf16.msra.mxu0 %v290
      %367 = vmatprep.subr.bf16.mxu0 0
      %368 = vmatpush1.bf16.msra.mxu0 %v291
      %369 = vmatprep.subr.bf16.mxu0 0
      %370 = vmatpush1.bf16.msra.mxu0 %v292
      %371 = vmatprep.subr.bf16.mxu0 0
      %372 = vmatpush1.bf16.msra.mxu0 %v293
      %373 = vmatprep.subr.bf16.mxu0 0
      %374 = vmatpush1.bf16.msra.mxu0 %v294
      %375 = vmatprep.mubr.bf16.mxu0 %v144
      %376 = vmatmul.mubr.bf16.gmra.mrb[0].mxu0 %v143
      %v377 = vpop.f32.mrb[0].mxu0
      %v378 = vadd.f32 0.0, %v377
      %v379 = vpop.f32.mrb[0].mxu0
      %v380 = vpop.f32.mrb[0].mxu0
      %v381 = vpop.f32.mrb[0].mxu0
      %382 = vdwg.mxu0
      %383 = vmatprep.subr.bf16.mxu0 0
      %384 = vmatpush1.bf16.msra.mxu0 %v295
      %385 = vmatprep.subr.bf16.mxu0 0
      %386 = vmatpush1.bf16.msra.mxu0 %v296
      %387 = vmatprep.subr.bf16.mxu0 0
      %388 = vmatpush1.bf16.msra.mxu0 %v297
      %389 = vmatprep.subr.bf16.mxu0 0
      %390 = vmatpush1.bf16.msra.mxu0 %v298
      %391 = vmatprep.subr.bf16.mxu0 0
      %392 = vmatpush1.bf16.msra.mxu0 %v299
      %393 = vmatprep.subr.bf16.mxu0 0
      %394 = vmatpush1.bf16.msra.mxu0 %v300
      %395 = vmatprep.subr.bf16.mxu0 0
      %396 = vmatpush1.bf16.msra.mxu0 %v301
      %397 = vmatprep.subr.bf16.mxu0 0
      %398 = vmatpush1.bf16.msra.mxu0 %v302
      %399 = vmatprep.subr.bf16.mxu0 0
      %400 = vmatpush1.bf16.msra.mxu0 %v303
      %401 = vmatprep.subr.bf16.mxu0 0
      %402 = vmatpush1.bf16.msra.mxu0 %v304
      %403 = vmatprep.subr.bf16.mxu0 0
      %404 = vmatpush1.bf16.msra.mxu0 %v305
      %405 = vmatprep.subr.bf16.mxu0 0
      %406 = vmatpush1.bf16.msra.mxu0 %v306
      %407 = vmatprep.subr.bf16.mxu0 0
      %408 = vmatpush1.bf16.msra.mxu0 %v307
      %409 = vmatprep.subr.bf16.mxu0 0
      %410 = vmatpush1.bf16.msra.mxu0 %v308
      %411 = vmatprep.subr.bf16.mxu0 0
      %412 = vmatpush1.bf16.msra.mxu0 %v309
      %413 = vmatprep.subr.bf16.mxu0 0
      %414 = vmatpush1.bf16.msra.mxu0 %v310
      %415 = vmatprep.mubr.bf16.mxu0 %v146
      %416 = vmatmul.mubr.bf16.gmra.mrb[0].mxu0 %v145
      %v417 = vpop.f32.mrb[0].mxu0
      %v418 = vadd.f32 %v378, %v417
      %v419 = vpop.f32.mrb[0].mxu0
      %v420 = vpop.f32.mrb[0].mxu0
      %v421 = vpop.f32.mrb[0].mxu0
      %422 = vdwg.mxu0
      %v423 = vadd.f32 %v70, %v418
      %424 = vst [vmem:[#allocation11] sm:$0xff] %v423
    $region25: #{tpu_custom_call.1} parent=1 // pred_fallthru
      _
    // Predicated region
    $region26: #{tpu_custom_call.1} parent=1 // pred_check
      _
    $region27: #{tpu_custom_call.1} parent=1 // pred_check_branch
      %426 = sbr.rel (0) target = $region29
    $region28: #{tpu_custom_call.1} parent=1 // pred_region
      %s428 = ssub.s32 128, 128
      %429 = vsyncadd [#allocation8], %s428
      %s431 = sshll.u32 [#allocation11], 4
      %s432 = int_to_ptr.vmem [resolvable:$true] %s431
      %434 = dma.vmem_to_hbm [thread:$0]  %s432, 128, %s5, [#allocation8]
    $region29: #{tpu_custom_call.1} parent=1 // pred_fallthru
      _
    // Predicated region
    $region30: #{tpu_custom_call.1} parent=1 // pred_check
      _
    $region31: #{tpu_custom_call.1} parent=1 // pred_check_branch
      %436 = sbr.rel (0) target = $region33
    $region32: #{tpu_custom_call.1} parent=1 // pred_region
      %437 = dma.done [#allocation8], 128
    $region33: #{tpu_custom_call.1} parent=1 // pred_fallthru
      _
    %438 = vsyncpa [#allocation7], 1
    %439 = vsyncpa [#allocation10], 1
    %440 = vsyncpa [#allocation8], 1

</llo_original>
